<compile_context>
chip_gen: v7x
topology: tpu7x:2x2x1
jax: 0.10.0
libtpu: 0.0.40
codegen_flags: <defaults>
</compile_context>

<pallas_src>
import functools

import jax
import jax.numpy as jnp
import numpy as np
from jax.experimental import pallas as pl
from jax.experimental.pallas import tpu as pltpu


# ----------------------------------------------------------------------------
# Device / budget helpers (host-side, best effort)
# ----------------------------------------------------------------------------
def _device_info():
    """Return (vmem_capacity_bytes, multicore) best-effort from device_kind."""
    kind = ""
    try:
        kind = jax.devices()[0].device_kind.lower()
    except Exception:
        pass
    if "v7" in kind or "7x" in kind:
        return 64 << 20, True          # v7x: 64 MiB VMEM per TC, 2 TCs/chip
    if any(v in kind for v in ("v3", "v4", "v5", "v6")):
        return 128 << 20, False        # v5e/v6e-class: 128 MiB VMEM, 1 TC grid
    return 64 << 20, True              # unknown: conservative VMEM, assume megacore


def _budgets(vmem_cap):
    """(per-block byte budget, scoped vmem limit) by generation."""
    if vmem_cap >= (128 << 20):        # v5e / v6e: plenty of VMEM
        return 8 << 20, 64 << 20       # 8 MiB blocks, 64 MiB scoped limit
    return 4 << 20, 32 << 20           # v7x: 4 MiB blocks, 32 MiB scoped limit


_DEVICE_INFO = _device_info()


def _sublane_multiple(itemsize):
    # f32 -> 8, bf16 -> 16, int8/fp8 -> 32 (packed sublane count per vreg).
    return max(8, 32 // max(int(itemsize), 1))


# ----------------------------------------------------------------------------
# Kernels
# ----------------------------------------------------------------------------
def _elementwise_kernel(x_ref, o_ref, *, name):
    x = x_ref[...]
    if name == "sigmoid":
        # sigmoid(x) = 0.5 * tanh(0.5 * x) + 0.5  -> single EUP push, no divide.
        y = jnp.tanh(x * 0.5) * 0.5 + 0.5
    else:  # tanh
        y = jnp.tanh(x)
    o_ref[...] = y.astype(o_ref.dtype)


def _softmax_lane_kernel(x_ref, o_ref, *, log):
    # (log-)softmax over the trailing (lane) axis of a (rows, C) tile.
    x = x_ref[...].astype(jnp.float32)
    m = jnp.max(x, axis=-1, keepdims=True)
    e = jnp.exp(x - m)
    s = jnp.sum(e, axis=-1, keepdims=True)
    if log:
        y = (x - m) - jnp.log(s)
    else:
        y = e / s
    o_ref[...] = y.astype(o_ref.dtype)


def _softmax_channel_kernel(x_ref, o_ref, *, log):
    # (log-)softmax over the channel (sublane) axis of a (tb, C, t) tile.
    # Lane axis stays dense -> unmasked vld/vst.
    x = x_ref[...].astype(jnp.float32)
    m = jnp.max(x, axis=1, keepdims=True)
    e = jnp.exp(x - m)
    s = jnp.sum(e, axis=1, keepdims=True)
    if log:
        y = (x - m) - jnp.log(s)
    else:
        y = e / s
    o_ref[...] = y.astype(o_ref.dtype)


# ----------------------------------------------------------------------------
# Wrappers (glue is free reshapes only; hot path stays in Pallas)
# ----------------------------------------------------------------------------
def _elementwise(x, name):
    shape = x.shape
    dtype = x.dtype
    n = int(x.size)
    if n == 0:
        return x

    vmem_cap, multicore = _DEVICE_INFO
    budget, vmem_limit = _budgets(vmem_cap)
    itemsize = dtype.itemsize
    sub = _sublane_multiple(itemsize)

    # Divisor-based (rows, lane) factorization: no pad/slice HBM round-trip.
    lane = None
    for cand in (1024, 512, 256, 128):
        if n % cand == 0:
            lane = cand
            break

    padded = False
    if lane is None:
        # Rare irregular size: pad once to a 128 multiple.
        # TODO(synk): handle the <128-element tail outside the kernel instead.
        lane = 128
        n_pad = -(-n // lane) * lane
        flat = jnp.pad(x.reshape(-1), (0, n_pad - n))
        padded = True
    else:
        n_pad = n
        flat = x.reshape(-1)

    rows = n_pad // lane
    x2 = flat.reshape(rows, lane)

    # Row tile from the byte budget, rounded to the dtype sublane packing.
    tr = max(sub, (budget // (lane * itemsize) // sub) * sub)
    if multicore and rows >= 2 * sub:
        tr = min(tr, max(sub, (rows // 2 // sub) * sub))  # >=2 blocks (megacore)
    tr = min(tr, rows)

    y2 = pl.pallas_call(
        functools.partial(_elementwise_kernel, name=name),
        out_shape=jax.ShapeDtypeStruct((rows, lane), dtype),
        grid_spec=pltpu.PrefetchScalarGridSpec(
            num_scalar_prefetch=0,
            grid=(pl.cdiv(rows, tr),),
            in_specs=[pl.BlockSpec((tr, lane), lambda i: (i, 0))],
            out_specs=pl.BlockSpec((tr, lane), lambda i: (i, 0)),
        ),
        compiler_params=pltpu.CompilerParams(
            dimension_semantics=("parallel",),
            vmem_limit_bytes=vmem_limit,
        ),
    )(x2)

    out = y2.reshape(-1)
    if padded:
        out = out[:n]
    return out.reshape(shape)


def _softmax(x, dim, log):
    shape = x.shape
    dtype = x.dtype
    if x.ndim == 0:
        return jnp.zeros_like(x) if log else jnp.ones_like(x)
    if x.size == 0:
        return x

    dim = dim % x.ndim
    C = int(shape[dim])
    outer = int(np.prod(shape[:dim], dtype=np.int64)) if dim > 0 else 1
    inner = int(np.prod(shape[dim + 1:], dtype=np.int64)) if dim < x.ndim - 1 else 1

    vmem_cap, multicore = _DEVICE_INFO
    budget, vmem_limit = _budgets(vmem_cap)
    itemsize = dtype.itemsize
    sub = _sublane_multiple(itemsize)
    row_cost = itemsize + 4  # block bytes + in-kernel f32 temporaries

    if inner == 1:
        # ---- reduction over the trailing (lane) axis: row softmax ---------
        # NOTE: when C < 128 the output lane axis is only C/128 utilized
        # (masked stores); a packed / segmented-lane variant would recover
        # full store bandwidth for tiny C.
        # TODO(synk): two-pass/online softmax for C too large for one block.
        x2 = x.reshape(outer, C)
        tr = max(sub, (budget // max(C * row_cost, 1) // sub) * sub)
        if multicore and outer >= 2 * sub:
            tr = min(tr, max(sub, (outer // 2 // sub) * sub))  # >=2 blocks
        tr = min(tr, outer)

        y2 = pl.pallas_call(
            functools.partial(_softmax_lane_kernel, log=log),
            out_shape=jax.ShapeDtypeStruct((outer, C), dtype),
            grid_spec=pltpu.PrefetchScalarGridSpec(
                num_scalar_prefetch=0,
                grid=(pl.cdiv(outer, tr),),
                in_specs=[pl.BlockSpec((tr, C), lambda i: (i, 0))],
                out_specs=pl.BlockSpec((tr, C), lambda i: (i, 0)),
            ),
            compiler_params=pltpu.CompilerParams(
                dimension_semantics=("parallel",),
                vmem_limit_bytes=vmem_limit,
            ),
        )(x2)
        return y2.reshape(shape)

    # ---- reduction over a non-trailing axis (e.g. NCHW channels) ----------
    # Keep the trailing spatial product on the lane axis (dense DMA/stores);
    # reduce over the C sublane axis in-kernel.  No HBM transposes.
    x3 = x.reshape(outer, C, inner)

    if inner >= 128:
        t_cap = max(128, (budget // max(C * row_cost, 1) // 128) * 128)
        t = min((inner // 128) * 128, t_cap)
    else:
        t = inner  # tiny trailing dim: full-dim block (lane-sparse, unavoidable)

    # Pack many outer rows per grid step to amortize per-step overhead.
    tb = max(1, budget // max(C * t * row_cost, 1))
    tb = min(tb, outer)

    grid_o = -(-outer // tb)
    grid_i = -(-inner // t)
    if multicore and grid_o * grid_i < 2:
        # keep both v7x TensorCores busy: split inner first, else outer.
        if inner >= 256:
            t = max(128, ((inner // 2) // 128) * 128)
            grid_i = -(-inner // t)
        elif outer >= 2:
            tb = -(-outer // 2)
            grid_o = -(-outer // tb)

    y3 = pl.pallas_call(
        functools.partial(_softmax_channel_kernel, log=log),
        out_shape=jax.ShapeDtypeStruct((outer, C, inner), dtype),
        grid_spec=pltpu.PrefetchScalarGridSpec(
            num_scalar_prefetch=0,
            grid=(grid_o, grid_i),
            in_specs=[pl.BlockSpec((tb, C, t), lambda i, j: (i, 0, j))],
            out_specs=pl.BlockSpec((tb, C, t), lambda i, j: (i, 0, j)),
        ),
        compiler_params=pltpu.CompilerParams(
            dimension_semantics=("parallel", "parallel"),
            vmem_limit_bytes=vmem_limit,
        ),
    )(x3)
    return y3.reshape(shape)


def _implicit_softmax_dim(ndim):
    # Mirrors torch.nn.functional._get_softmax_dim (legacy implicit-dim rule).
    return 0 if ndim in (0, 1, 3) else 1


def activation(x, name=None, dim=None):
    """Pallas equivalent of terumo_seg_esclerose Activation.forward."""
    if name is None or name == "identity":
        return x  # no-op: skip the kernel entirely (zero HBM traffic)
    if name == "sigmoid":
        return _elementwise(x, "sigmoid")
    if name == "tanh":
        return _elementwise(x, "tanh")
    if name == "softmax2d":
        # NOTE: mirrors the module's nn.Softmax(dim=1) (not nn.Softmax2d's -3).
        return _softmax(x, dim=1, log=False)
    if name == "softmax":
        d = _implicit_softmax_dim(x.ndim) if dim is None else dim
        return _softmax(x, dim=d, log=False)
    if name == "logsoftmax":
        d = _implicit_softmax_dim(x.ndim) if dim is None else dim
        return _softmax(x, dim=d, log=True)
    raise ValueError(
        "Activation should be callable/sigmoid/softmax/logsoftmax/tanh/"
        f"argmax/argmax2d/clamp/None; got {name}"
    )


class Activation:
    """Forward-only mirror of the PyTorch Activation module."""

    def __init__(self, name, **params):
        if name not in (None, "identity", "sigmoid", "softmax2d", "softmax",
                        "logsoftmax", "tanh"):
            raise ValueError(
                "Activation should be callable/sigmoid/softmax/logsoftmax/"
                f"tanh/argmax/argmax2d/clamp/None; got {name}")
        self.name = name
        self.dim = params.get("dim", None)

    def __call__(self, x):
        return activation(x, self.name, dim=self.dim)


# ----------------------------------------------------------------------------
# Self test
# ----------------------------------------------------------------------------
if __name__ == "__main__":
    key = jax.random.PRNGKey(0)
    # NCHW, consistent with segmentation-model outputs: (N=2, C=4, H=16, W=16)
    x = jax.random.normal(key, (2, 4, 16, 16), dtype=jnp.float32)

    checks = []

    # identity (short-circuit path)
    y = jax.block_until_ready(activation(x, "identity"))
    checks.append(np.allclose(np.asarray(y), np.asarray(x)))

    # sigmoid (exact tanh-based formulation)
    y = jax.block_until_ready(activation(x, "sigmoid"))
    checks.append(np.allclose(np.asarray(y), np.asarray(jax.nn.sigmoid(x)),
                              atol=1e-5, rtol=1e-5))

    # tanh
    y = jax.block_until_ready(activation(x, "tanh"))
    checks.append(np.allclose(np.asarray(y), np.asarray(jnp.tanh(x)),
                              atol=1e-5, rtol=1e-5))

    # softmax2d (softmax over channel dim=1)
    y = jax.block_until_ready(activation(x, "softmax2d"))
    checks.append(np.allclose(np.asarray(y),
                              np.asarray(jax.nn.softmax(x, axis=1)),
                              atol=1e-5, rtol=1e-5))

    # softmax with explicit dim (channel kernel)
    y = jax.block_until_ready(activation(x, "softmax", dim=1))
    checks.append(np.allclose(np.asarray(y),
                              np.asarray(jax.nn.softmax(x, axis=1)),
                              atol=1e-5, rtol=1e-5))

    # logsoftmax with explicit dim
    y = jax.block_until_ready(activation(x, "logsoftmax", dim=1))
    checks.append(np.allclose(np.asarray(y),
                              np.asarray(jax.nn.log_softmax(x, axis=1)),
                              atol=1e-5, rtol=1e-5))

    # softmax over the trailing axis (exercise the lane-reduction kernel)
    y = jax.block_until_ready(activation(x, "softmax", dim=3))
    checks.append(np.allclose(np.asarray(y),
                              np.asarray(jax.nn.softmax(x, axis=3)),
                              atol=1e-5, rtol=1e-5))

    # class wrapper path
    act = Activation("logsoftmax", dim=1)
    y = jax.block_until_ready(act(x))
    checks.append(np.allclose(np.asarray(y),
                              np.asarray(jax.nn.log_softmax(x, axis=1)),
                              atol=1e-5, rtol=1e-5))

    assert all(checks), f"mismatch in activation checks: {checks}"
    print("KERNEL_OK")
</pallas_src>

<mosaic_0001>
module attributes {stable_mosaic.version = 11 : i64} {
  func.func @_elementwise_kernel(%arg0: i32, %arg1: memref<2x1024xf32, #tpu.memory_space<vmem>>, %arg2: memref<2x1024xf32, #tpu.memory_space<vmem>>) attributes {dimension_semantics = [#tpu.dimension_semantics<parallel>], iteration_bounds = array<i64: 1>, scalar_prefetch = 0 : i64, scratch_operands = 0 : i64, tpu.core_type = #tpu.core_type<tc>, window_params = [{transform_indices = @transform_0, window_bounds = array<i64: 2, 1024>}, {transform_indices = @transform_1, window_bounds = array<i64: 2, 1024>}]} {
    %c0 = arith.constant 0 : index
    %c0_0 = arith.constant 0 : index
    %0 = vector.load %arg1[%c0, %c0_0] : memref<2x1024xf32, #tpu.memory_space<vmem>>, vector<2x1024xf32>
    %cst = arith.constant 5.000000e-01 : f32
    %1 = vector.broadcast %cst : f32 to vector<2x1024xf32>
    %2 = arith.mulf %0, %1 : vector<2x1024xf32>
    %3 = math.tanh %2 : vector<2x1024xf32>
    %cst_1 = arith.constant 5.000000e-01 : f32
    %4 = vector.broadcast %cst_1 : f32 to vector<2x1024xf32>
    %5 = arith.mulf %3, %4 : vector<2x1024xf32>
    %cst_2 = arith.constant 5.000000e-01 : f32
    %6 = vector.broadcast %cst_2 : f32 to vector<2x1024xf32>
    %7 = arith.addf %5, %6 : vector<2x1024xf32>
    %c0_3 = arith.constant 0 : index
    %c0_4 = arith.constant 0 : index
    %8 = vector.load %arg2[%c0_3, %c0_4] : memref<2x1024xf32, #tpu.memory_space<vmem>>, vector<2x1024xf32>
    tpu.vector_store %arg2[%c0_3, %c0_4], %7 {strides = array<i32>} : memref<2x1024xf32, #tpu.memory_space<vmem>>, vector<2x1024xf32>,
    return
  }
  func.func @transform_0(%arg0: i32) -> (i32, i32) {
    %c0_i32 = arith.constant 0 : i32
    %c0_i32_0 = arith.constant 0 : i32
    return %arg0, %c0_i32 : i32, i32
  }
  func.func @transform_1(%arg0: i32) -> (i32, i32) {
    %c0_i32 = arith.constant 0 : i32
    %c0_i32_0 = arith.constant 0 : i32
    return %arg0, %c0_i32 : i32, i32
  }
}

</mosaic_0001>

<llo_original>
// kernel: tpu_custom_call.1
$region0: #{tpu_custom_call.1}
  #allocation0 [shape = 'u32[]', space=smem, size = 0x4, offset = 0x4, fixed_abs, tag = 'smem constant byte address 0x4 - core index']
  #allocation1 [shape = 'u32[144,128]{1,0:T(1,128)}', space=vmem, size = 0x12000, scoped, tag = 'internal scratch']
  %s0 = inlined_call_operand.hbm [shape: f32[2,1024], index: 0, kind: input, shape index: {}]
  %s1 = inlined_call_operand.hbm [shape: f32[2,1024], index: 1, kind: output, shape index: {}]
  %s2 = sld [smem:[#allocation0]]
  $region18: #{tpu_custom_call.1} parent=0
    _
  %s4 = ssub.s32 1, %s2
  %s5 = scalar_select 0, %s4, %s2
  $region1: #{tpu_custom_call.1} parent=0
    #allocation2 [shape = 'u8[8192]{0}', space=vmem, size = 0x2000, scoped, tag = 'input window, operand 0, single buffered']
    #allocation3 [shape = 's32[1]{0}', space=sflag, size = 0x4, scoped, tag = 'scoped memory for tpu_custom_call.1']
    #allocation4 [shape = 's32[1]{0}', space=sflag, size = 0x4, scoped, tag = 'scoped memory for tpu_custom_call.1']
    #allocation5 [shape = 'u8[8192]{0}', space=vmem, size = 0x2000, scoped, tag = 'output window, operand 0, single buffered']
    %6 = vsyncpa [#allocation3], 0
    %7 = vsyncpa [#allocation4], 0
    // Predicated region
    $region2: #{tpu_custom_call.1} parent=1 // pred_check
      _
    $region3: #{tpu_custom_call.1} parent=1 // pred_check_branch
      %9 = sbr.rel (0) target = $region5
    $region4: #{tpu_custom_call.1} parent=1 // pred_region
      %s11 = ssub.s32 256, 256
      %12 = vsyncadd [#allocation3], %s11
      %s14 = sshll.u32 [#allocation2], 4
      %s15 = int_to_ptr.vmem [resolvable:$true] %s14
      %17 = dma.hbm_to_vmem [thread:$0]  %s0, 256, %s15, [#allocation3]
    $region5: #{tpu_custom_call.1} parent=1 // pred_fallthru
      _
    // Predicated region
    $region6: #{tpu_custom_call.1} parent=1 // pred_check
      _
    $region7: #{tpu_custom_call.1} parent=1 // pred_check_branch
      %19 = sbr.rel (0) target = $region9
    $region8: #{tpu_custom_call.1} parent=1 // pred_region
      %20 = dma.done [#allocation3], 256
    $region9: #{tpu_custom_call.1} parent=1 // pred_fallthru
      _
    %v21 = vld [vmem:[#allocation2] sm:$0xff]
    %v22 = vld [vmem:[#allocation2 + $0x8] sm:$0xff]
    %v23 = vmul.f32 %v21, 0.5
    %v24 = vmul.f32 %v22, 0.5
    %v25 = vtanh.pop %v23
    %v26 = vtanh.pop %v24
    %v27 = vmul.f32 %v25, 0.5
    %v28 = vmul.f32 %v26, 0.5
    %v29 = vadd.f32 %v27, 0.5
    %v30 = vadd.f32 %v28, 0.5
    %31 = vst [vmem:[#allocation5] sm:$0xff] %v29
    %32 = vst [vmem:[#allocation5 + $0x8] sm:$0xff] %v30
    // Predicated region
    $region10: #{tpu_custom_call.1} parent=1 // pred_check
      _
    $region11: #{tpu_custom_call.1} parent=1 // pred_check_branch
      %34 = sbr.rel (0) target = $region13
    $region12: #{tpu_custom_call.1} parent=1 // pred_region
      %s36 = ssub.s32 256, 256
      %37 = vsyncadd [#allocation4], %s36
      %s39 = sshll.u32 [#allocation5], 4
      %s40 = int_to_ptr.vmem [resolvable:$true] %s39
      %42 = dma.vmem_to_hbm [thread:$0]  %s40, 256, %s1, [#allocation4]
    $region13: #{tpu_custom_call.1} parent=1 // pred_fallthru
      _
    // Predicated region
    $region14: #{tpu_custom_call.1} parent=1 // pred_check
      _
    $region15: #{tpu_custom_call.1} parent=1 // pred_check_branch
      %44 = sbr.rel (0) target = $region17
    $region16: #{tpu_custom_call.1} parent=1 // pred_region
      %45 = dma.done [#allocation4], 256
    $region17: #{tpu_custom_call.1} parent=1 // pred_fallthru
      _
    %46 = vsyncpa [#allocation3], 1
    %47 = vsyncpa [#allocation4], 1

</llo_original>
